<compile_context>
chip_gen: v7x
topology: tpu7x:2x2x1
jax: 0.10.0
libtpu: 0.0.40
codegen_flags: <defaults>
</compile_context>

<pallas_src>
import functools
import math

import jax
import jax.numpy as jnp
from jax.experimental import pallas as pl
from jax.experimental.pallas import tpu as pltpu

LN_EPS = 1e-5

# Abramowitz & Stegun 7.1.26 erf approximation (max abs err ~1.5e-7): gives
# exact-GELU semantics without relying on an erf lowering in Mosaic.
_ERF_P = 0.3275911
_ERF_A = (0.254829592, -0.284496736, 1.421413741, -1.453152027, 1.061405429)
_INV_SQRT2 = 0.7071067811865476


def _erf_approx(x):
    a1, a2, a3, a4, a5 = _ERF_A
    ax = jnp.abs(x)
    t = 1.0 / (1.0 + _ERF_P * ax)
    poly = ((((a5 * t + a4) * t + a3) * t + a2) * t + a1) * t
    y = 1.0 - poly * jnp.exp(-ax * ax)
    return jnp.where(x >= 0, y, -y)


# ----------------------------- Pallas kernels -----------------------------

def _dwconv_kernel(xpad_ref, w_ref, b_ref, o_ref):
    """ConvPosEnc: out = x + depthwise3x3(x) + bias, NHWC tile, residual taken
    from the interior of the padded input."""
    _, H, W, C = o_ref.shape
    xpad = xpad_ref[0].astype(jnp.float32)          # (H+2, W+2, C)
    w = w_ref[...].astype(jnp.float32)              # (9, C) = (ky*3+kx, C)
    b = b_ref[...].astype(jnp.float32)              # (1, C)
    acc = xpad[1:H + 1, 1:W + 1, :] + b[0]          # residual + conv bias
    for dy in range(3):
        for dx in range(3):
            acc = acc + xpad[dy:dy + H, dx:dx + W, :] * w[dy * 3 + dx]
    o_ref[0] = acc.astype(o_ref.dtype)


def _attn_kernel(*refs, num_windows, win_tokens, num_heads, head_dim, scale,
                 eps, has_mask):
    """Fused: out = x + proj( window_attention( LN(x) [* pad_mask] ) ).

    The block is WB windows flattened to (WB*N, C); LN/QKV/proj run on the big
    2-D slab (MXU-shaped, bf16 operands / f32 accumulation), attention runs per
    window via batched 3-D einsums on reshaped views (no scratch repacks).
    """
    if has_mask:
        (xw_ref, mask_ref, g_ref, bt_ref, wqkv_ref, bqkv_ref,
         wproj_ref, bproj_ref, o_ref) = refs
    else:
        mask_ref = None
        (xw_ref, g_ref, bt_ref, wqkv_ref, bqkv_ref,
         wproj_ref, bproj_ref, o_ref) = refs

    C = num_heads * head_dim
    N = win_tokens
    WB = num_windows
    x = xw_ref[...].astype(jnp.float32)                         # (WB*N, C)

    # LayerNorm (norm1) fused in; PyTorch pads the *normalized* tensor with
    # zeros, so padded tokens are zeroed after LN via the precomputed mask
    # (only present when the spatial padding actually exists).
    mu = jnp.mean(x, axis=-1, keepdims=True)
    var = jnp.mean(jnp.square(x - mu), axis=-1, keepdims=True)
    xn = ((x - mu) * jax.lax.rsqrt(var + eps) * g_ref[0].astype(jnp.float32)
          + bt_ref[0].astype(jnp.float32))
    if has_mask:
        xn = xn * mask_ref[...]

    # QKV over the whole slab: (WB*N, C) x (C, 3C), bf16 in / f32 out.
    qkv = jnp.dot(xn.astype(jnp.bfloat16), wqkv_ref[...].astype(jnp.bfloat16),
                  preferred_element_type=jnp.float32)
    qkv = qkv + bqkv_ref[0].astype(jnp.float32)

    # (WB*N, 3C) -> (WB, N, 3C): free sublane re-label when N % 8 == 0.
    qkv3 = qkv.reshape(WB, N, 3 * C)

    head_outs = []
    for h in range(num_heads):
        lo = h * head_dim
        qh = qkv3[:, :, lo:lo + head_dim] * scale               # (WB, N, hd)
        kh = qkv3[:, :, C + lo:C + lo + head_dim]
        vh = qkv3[:, :, 2 * C + lo:2 * C + lo + head_dim]
        s = jnp.einsum('bqd,bkd->bqk', qh, kh,
                       preferred_element_type=jnp.float32)      # (WB, N, N)
        s = s - jnp.max(s, axis=-1, keepdims=True)
        p = jnp.exp(s)
        p = p / jnp.sum(p, axis=-1, keepdims=True)              # exact softmax
        head_outs.append(jnp.einsum('bqk,bkd->bqd', p, vh,
                                    preferred_element_type=jnp.float32))
    o3 = jnp.concatenate(head_outs, axis=-1)                    # (WB, N, C)

    # Back to the flat slab (free re-label) for the projection matmul + residual.
    o2 = o3.reshape(WB * N, C)
    out = jnp.dot(o2.astype(jnp.bfloat16), wproj_ref[...].astype(jnp.bfloat16),
                  preferred_element_type=jnp.float32)
    out = out + bproj_ref[0].astype(jnp.float32)
    o_ref[...] = (x + out).astype(o_ref.dtype)


def _mlp_kernel(x_ref, g_ref, bt_ref, w1_ref, b1_ref, w2_ref, b2_ref, o_ref,
                *, eps):
    """Fused, row-tiled: out = x + fc2(GELU_exact(fc1(LayerNorm(x))))."""
    x = x_ref[...].astype(jnp.float32)                          # (TM, C)
    mu = jnp.mean(x, axis=-1, keepdims=True)
    var = jnp.mean(jnp.square(x - mu), axis=-1, keepdims=True)
    xn = ((x - mu) * jax.lax.rsqrt(var + eps) * g_ref[0].astype(jnp.float32)
          + bt_ref[0].astype(jnp.float32))
    h = jnp.dot(xn.astype(jnp.bfloat16), w1_ref[...].astype(jnp.bfloat16),
                preferred_element_type=jnp.float32)
    h = h + b1_ref[0].astype(jnp.float32)
    h = 0.5 * h * (1.0 + _erf_approx(h * _INV_SQRT2))           # exact nn.GELU
    y = jnp.dot(h.astype(jnp.bfloat16), w2_ref[...].astype(jnp.bfloat16),
                preferred_element_type=jnp.float32)
    y = y + b2_ref[0].astype(jnp.float32)
    o_ref[...] = (x + y).astype(o_ref.dtype)


# ----------------------------- tiling helpers ------------------------------

@functools.lru_cache(maxsize=None)
def _tpu_vmem_bytes():
    """Physical per-core VMEM (v5e/v6e: 128 MiB, v7x: 64 MiB); safe fallback."""
    try:
        return int(pltpu.get_tpu_info().vmem_capacity_bytes)
    except Exception:
        return 64 * 1024 * 1024


def _vmem_budget():
    return int(_tpu_vmem_bytes() * 0.4)


def _vmem_limit():
    return min(int(_tpu_vmem_bytes() * 0.75), 100 * 1024 * 1024)


def _pick_window_batch(n_windows, n_tokens, channels, vmem_budget):
    """Windows per attention block: 8-aligned rows, VMEM-budgeted, >=2 steps."""
    g = 8 // math.gcd(n_tokens, 8)           # smallest WB keeping WB*N 8-aligned
    bytes_per_row = 14 * 4 * channels        # dbl-buffered in/out + f32 temps
    weight_bytes = 2 * 2 * 4 * channels * channels + 64 * channels   # bf16 x2
    rows_cap = max((vmem_budget - weight_bytes) // bytes_per_row, g * n_tokens)
    rows_cap = min(rows_cap, 2048)
    wb = max((rows_cap // n_tokens) // g * g, g)
    if n_windows > g:                        # prefer >=2 grid steps (v7x 2 TCs)
        wb_half = math.ceil(math.ceil(n_windows / 2) / g) * g
        wb = min(wb, wb_half)
    return max(wb, g)


def _pick_row_tile(m, channels, hidden, vmem_budget):
    """MLP row tile: 8-aligned, VMEM-budgeted, >=2 steps; returns (TM, pad)."""
    bytes_per_row = 4 * (6 * channels + 3 * hidden)
    weight_bytes = 2 * 2 * 2 * channels * hidden + 64 * (channels + hidden)
    cap = max((vmem_budget - weight_bytes) // bytes_per_row, 8)
    cap = int(min(cap, 2048))
    if m >= 16:
        cap = min(cap, max((m // 2) // 8 * 8, 8))
    for t in range(min(cap, m) // 8 * 8, 7, -8):     # divisor -> no row padding
        if m % t == 0:
            return t, 0
    t = max(cap // 8 * 8, 8)                         # pad rows to a multiple
    return t, (-m) % t


# ----------------------------- wrappers -----------------------------------

def conv_pos_enc(x, H, W, w, b):
    """ConvPosEnc (act=Identity): x (B, L, C) -> (B, L, C)."""
    B, L, C = x.shape
    xs = x.reshape(B, H, W, C)
    xpad = jnp.pad(xs, ((0, 0), (1, 1), (1, 1), (0, 0)))
    out = pl.pallas_call(
        _dwconv_kernel,
        out_shape=jax.ShapeDtypeStruct((B, H, W, C), x.dtype),
        grid=(B,),
        in_specs=[
            pl.BlockSpec((1, H + 2, W + 2, C), lambda i: (i, 0, 0, 0)),
            pl.BlockSpec((9, C), lambda i: (0, 0)),
            pl.BlockSpec((1, C), lambda i: (0, 0)),
        ],
        out_specs=pl.BlockSpec((1, H, W, C), lambda i: (i, 0, 0, 0)),
        compiler_params=pltpu.CompilerParams(
            dimension_semantics=("parallel",),
            vmem_limit_bytes=_vmem_limit()),
    )(xpad, w, b)
    return out.reshape(B, L, C)


def window_attention(xw2, mask, params, num_heads, *, num_windows_total,
                     win_tokens):
    """Fused LN1 + W-MSA + proj + residual over batched windows.

    xw2:  (nWB*N, C) raw (un-normalized) shortcut tokens in window order.
    mask: (nWB*N, 1) float validity mask, or None when no spatial padding.
    """
    total_rows, C = xw2.shape
    N = win_tokens
    head_dim = C // num_heads
    scale = head_dim ** (-0.5)

    WB = _pick_window_batch(num_windows_total, N, C, _vmem_budget())
    nw_pad = -(-num_windows_total // WB) * WB        # pad with dummy windows
    rows = WB * N
    pad_rows = nw_pad * N - total_rows
    if pad_rows:
        xw2 = jnp.pad(xw2, ((0, pad_rows), (0, 0)))
        if mask is not None:
            mask = jnp.pad(mask, ((0, pad_rows), (0, 0)))
    has_mask = mask is not None

    kernel = functools.partial(
        _attn_kernel, num_windows=WB, win_tokens=N, num_heads=num_heads,
        head_dim=head_dim, scale=scale, eps=LN_EPS, has_mask=has_mask)

    in_specs = [pl.BlockSpec((rows, C), lambda s: (s, 0))]
    inputs = [xw2]
    if has_mask:
        in_specs.append(pl.BlockSpec((rows, 1), lambda s: (s, 0)))
        inputs.append(mask)
    in_specs += [
        pl.BlockSpec((1, C), lambda s: (0, 0)),
        pl.BlockSpec((1, C), lambda s: (0, 0)),
        pl.BlockSpec((C, 3 * C), lambda s: (0, 0)),
        pl.BlockSpec((1, 3 * C), lambda s: (0, 0)),
        pl.BlockSpec((C, C), lambda s: (0, 0)),
        pl.BlockSpec((1, C), lambda s: (0, 0)),
    ]
    inputs += [params["gamma1"], params["beta1"], params["wqkv"],
               params["bqkv"], params["wproj"], params["bproj"]]

    out = pl.pallas_call(
        kernel,
        out_shape=jax.ShapeDtypeStruct((nw_pad * N, C), xw2.dtype),
        grid=(nw_pad // WB,),
        in_specs=in_specs,
        out_specs=pl.BlockSpec((rows, C), lambda s: (s, 0)),
        compiler_params=pltpu.CompilerParams(
            dimension_semantics=("parallel",),
            vmem_limit_bytes=_vmem_limit()),
    )(*inputs)
    return out[:total_rows] if pad_rows else out


def mlp_block(x2d, params):
    M, C = x2d.shape
    Hd = params["w1"].shape[1]
    TM, pad = _pick_row_tile(M, C, Hd, _vmem_budget())
    xp = jnp.pad(x2d, ((0, pad), (0, 0))) if pad else x2d
    Mp = M + pad
    kernel = functools.partial(_mlp_kernel, eps=LN_EPS)
    out = pl.pallas_call(
        kernel,
        out_shape=jax.ShapeDtypeStruct((Mp, C), x2d.dtype),
        grid=(Mp // TM,),
        in_specs=[
            pl.BlockSpec((TM, C), lambda i: (i, 0)),
            pl.BlockSpec((1, C), lambda i: (0, 0)),
            pl.BlockSpec((1, C), lambda i: (0, 0)),
            pl.BlockSpec((C, Hd), lambda i: (0, 0)),
            pl.BlockSpec((1, Hd), lambda i: (0, 0)),
            pl.BlockSpec((Hd, C), lambda i: (0, 0)),
            pl.BlockSpec((1, C), lambda i: (0, 0)),
        ],
        out_specs=pl.BlockSpec((TM, C), lambda i: (i, 0)),
        compiler_params=pltpu.CompilerParams(
            dimension_semantics=("parallel",),
            vmem_limit_bytes=_vmem_limit()),
    )(xp, params["gamma2"], params["beta2"], params["w1"], params["b1"],
      params["w2"], params["b2"])
    return out[:M] if pad else out


def spatial_block_forward(x, size, params, window_size, num_heads):
    """SpatialBlock.forward.  x: (B, L, C), size=(H, W).  drop_path=0 -> Identity."""
    H, W = size
    B, L, C = x.shape
    assert L == H * W, "input feature has wrong size"
    ws = window_size

    # cpe[0]  (residual fused in-kernel)
    shortcut = conv_pos_enc(x, H, W, params["cpe0_w"], params["cpe0_b"])

    # window partition of the RAW shortcut (norm1 + residual fused into attention)
    pad_b = (ws - H % ws) % ws
    pad_r = (ws - W % ws) % ws
    Hp, Wp = H + pad_b, W + pad_r
    nWi, nWj = Hp // ws, Wp // ws
    N = ws * ws
    nWB = B * nWi * nWj

    xs = shortcut.reshape(B, H, W, C)
    if pad_b or pad_r:
        xs = jnp.pad(xs, ((0, 0), (0, pad_b), (0, pad_r), (0, 0)))
    xw = (xs.reshape(B, nWi, ws, nWj, ws, C)
            .transpose(0, 1, 3, 2, 4, 5)
            .reshape(nWB * N, C))

    # validity mask only when spatial padding exists: PyTorch pads the
    # *normalized* tensor with zeros, so padded tokens must be exactly zero
    # after the fused in-kernel LayerNorm.
    if pad_b or pad_r:
        row_ok = (jnp.arange(nWi)[:, None] * ws + jnp.arange(ws)[None, :]) < H
        col_ok = (jnp.arange(nWj)[:, None] * ws + jnp.arange(ws)[None, :]) < W
        valid = row_ok[:, None, :, None] & col_ok[None, :, None, :]
        mask = jnp.broadcast_to(valid[None], (B, nWi, nWj, ws, ws))
        mask = mask.reshape(nWB * N, 1).astype(jnp.float32)
    else:
        mask = None

    # fused norm1 + window attention + proj + residual (shortcut added in-kernel)
    attn_out = window_attention(xw, mask, params, num_heads,
                                num_windows_total=nWB, win_tokens=N)

    # window reverse + unpad  (output already contains the residual)
    xr = (attn_out.reshape(B, nWi, nWj, ws, ws, C)
                  .transpose(0, 1, 3, 2, 4, 5)
                  .reshape(B, Hp, Wp, C))[:, :H, :W, :].reshape(B, L, C)

    # cpe[1]
    x1 = conv_pos_enc(xr, H, W, params["cpe1_w"], params["cpe1_b"])

    # ffn (fused LN2 + fc1 + exact GELU + fc2 + residual, row-tiled)
    out = mlp_block(x1.reshape(B * L, C), params).reshape(B, L, C)
    return out, size


# ----------------------------- pure-JAX reference --------------------------

def _f32(a):
    return a.astype(jnp.float32)


def _ref_cpe(x, H, W, w, b):
    B, L, C = x.shape
    xs = x.reshape(B, H, W, C)
    xpad = jnp.pad(xs, ((0, 0), (1, 1), (1, 1), (0, 0)))
    acc = jnp.zeros_like(xs)
    for dy in range(3):
        for dx in range(3):
            acc = acc + xpad[:, dy:dy + H, dx:dx + W, :] * w[dy * 3 + dx]
    return x + (acc + b[0]).reshape(B, L, C)


def _ref_ln(x, g, b):
    mu = x.mean(-1, keepdims=True)
    var = ((x - mu) ** 2).mean(-1, keepdims=True)
    return (x - mu) / jnp.sqrt(var + LN_EPS) * g[0] + b[0]


def reference_forward(x, size, p, window_size, num_heads):
    H, W = size
    B, L, C = x.shape
    ws = window_size
    shortcut = _ref_cpe(x, H, W, p["cpe0_w"], p["cpe0_b"])
    xn = _ref_ln(shortcut, p["gamma1"], p["beta1"]).reshape(B, H, W, C)
    pad_b = (ws - H % ws) % ws
    pad_r = (ws - W % ws) % ws
    xn = jnp.pad(xn, ((0, 0), (0, pad_b), (0, pad_r), (0, 0)))
    Hp, Wp = H + pad_b, W + pad_r
    xw = (xn.reshape(B, Hp // ws, ws, Wp // ws, ws, C)
            .transpose(0, 1, 3, 2, 4, 5).reshape(-1, ws * ws, C))
    nWB, N, _ = xw.shape
    hd = C // num_heads
    qkv = xw @ _f32(p["wqkv"]) + p["bqkv"][0]
    qkv = qkv.reshape(nWB, N, 3, num_heads, hd).transpose(2, 0, 3, 1, 4)
    q, k, v = qkv[0] * hd ** (-0.5), qkv[1], qkv[2]
    attn = jax.nn.softmax(q @ jnp.swapaxes(k, -2, -1), axis=-1)
    ao = (attn @ v).transpose(0, 2, 1, 3).reshape(nWB, N, C)
    ao = ao @ _f32(p["wproj"]) + p["bproj"][0]
    xr = (ao.reshape(B, Hp // ws, Wp // ws, ws, ws, C)
            .transpose(0, 1, 3, 2, 4, 5).reshape(B, Hp, Wp, C))
    xr = xr[:, :H, :W, :].reshape(B, L, C)
    x1 = shortcut + xr
    x1 = _ref_cpe(x1, H, W, p["cpe1_w"], p["cpe1_b"])
    h = _ref_ln(x1, p["gamma2"], p["beta2"]) @ _f32(p["w1"]) + p["b1"][0]
    h = jax.nn.gelu(h, approximate=False)                    # exact nn.GELU
    return x1 + h @ _f32(p["w2"]) + p["b2"][0]


# ----------------------------- main ----------------------------------------

if __name__ == "__main__":
    B, H, W = 2, 8, 8
    C, num_heads, window_size = 32, 4, 4
    mlp_ratio = 4.0
    hidden = int(C * mlp_ratio)
    L = H * W

    key = jax.random.PRNGKey(0)
    ks = jax.random.split(key, 16)

    def nrm(k, shape, s):
        return s * jax.random.normal(k, shape, jnp.float32)

    # Big matmul weights stored in bf16 (halved DMA, native MXU rate); biases,
    # LN params and depthwise-conv weights stay f32.
    params = dict(
        cpe0_w=nrm(ks[0], (9, C), 0.1), cpe0_b=nrm(ks[1], (1, C), 0.02),
        cpe1_w=nrm(ks[2], (9, C), 0.1), cpe1_b=nrm(ks[3], (1, C), 0.02),
        gamma1=jnp.ones((1, C), jnp.float32), beta1=jnp.zeros((1, C), jnp.float32),
        wqkv=nrm(ks[4], (C, 3 * C), 0.1).astype(jnp.bfloat16),
        bqkv=nrm(ks[5], (1, 3 * C), 0.02),
        wproj=nrm(ks[6], (C, C), 0.1).astype(jnp.bfloat16),
        bproj=nrm(ks[7], (1, C), 0.02),
        gamma2=jnp.ones((1, C), jnp.float32), beta2=jnp.zeros((1, C), jnp.float32),
        w1=nrm(ks[8], (C, hidden), 0.1).astype(jnp.bfloat16),
        b1=nrm(ks[9], (1, hidden), 0.02),
        w2=nrm(ks[10], (hidden, C), 0.1).astype(jnp.bfloat16),
        b2=nrm(ks[11], (1, C), 0.02),
    )

    x = jax.random.normal(ks[12], (B, L, C), jnp.float32)

    out, _ = spatial_block_forward(x, (H, W), params, window_size, num_heads)
    out = jax.block_until_ready(out)

    ref = reference_forward(x, (H, W), params, window_size, num_heads)
    assert out.shape == (B, L, C)
    max_err = float(jnp.max(jnp.abs(out - ref)))
    # bf16 matmul operands in the kernel (reference runs the same bf16-stored
    # weights in f32) -> tolerance loosened accordingly.
    assert jnp.allclose(out, ref, atol=2e-2, rtol=2e-2), max_err
    print("KERNEL_OK")
</pallas_src>

<mosaic_0001>
module attributes {stable_mosaic.version = 11 : i64} {
  func.func @_dwconv_kernel(%arg0: i32, %arg1: memref<1x10x10x32xf32, #tpu.memory_space<vmem>>, %arg2: memref<9x32xf32, #tpu.memory_space<vmem>>, %arg3: memref<1x32xf32, #tpu.memory_space<vmem>>, %arg4: memref<1x8x8x32xf32, #tpu.memory_space<vmem>>) attributes {dimension_semantics = [#tpu.dimension_semantics<parallel>], iteration_bounds = array<i64: 2>, scalar_prefetch = 0 : i64, scratch_operands = 0 : i64, tpu.core_type = #tpu.core_type<tc>, window_params = [{transform_indices = @transform_0, window_bounds = array<i64: 1, 10, 10, 32>}, {pipeline_mode = #tpu.pipeline_mode<synchronous>, transform_indices = @transform_1, window_bounds = array<i64: 9, 32>}, {pipeline_mode = #tpu.pipeline_mode<synchronous>, transform_indices = @transform_2, window_bounds = array<i64: 1, 32>}, {transform_indices = @transform_3, window_bounds = array<i64: 1, 8, 8, 32>}]} {
    %c0 = arith.constant 0 : index
    %c0_0 = arith.constant 0 : index
    %c0_1 = arith.constant 0 : index
    %c0_2 = arith.constant 0 : index
    %0 = vector.load %arg1[%c0, %c0_0, %c0_1, %c0_2] : memref<1x10x10x32xf32, #tpu.memory_space<vmem>>, vector<1x10x10x32xf32>
    %1 = vector.shape_cast %0 : vector<1x10x10x32xf32> to vector<10x10x32xf32>
    %c0_3 = arith.constant 0 : index
    %c0_4 = arith.constant 0 : index
    %2 = vector.load %arg2[%c0_3, %c0_4] : memref<9x32xf32, #tpu.memory_space<vmem>>, vector<9x32xf32>
    %c0_5 = arith.constant 0 : index
    %c0_6 = arith.constant 0 : index
    %3 = vector.load %arg3[%c0_5, %c0_6] : memref<1x32xf32, #tpu.memory_space<vmem>>, vector<1x32xf32>
    %4 = vector.extract_strided_slice %1 {offsets = [1, 1, 0], sizes = [8, 8, 32], strides = [1, 1, 1]} : vector<10x10x32xf32> to vector<8x8x32xf32>
    %5 = vector.shape_cast %3 : vector<1x32xf32> to vector<32xf32>
    %6 = vector.shape_cast %5 : vector<32xf32> to vector<1x1x32xf32>
    %7 = vector.broadcast %6 : vector<1x1x32xf32> to vector<8x8x32xf32>
    %8 = arith.addf %4, %7 : vector<8x8x32xf32>
    %9 = vector.extract_strided_slice %1 {offsets = [0, 0, 0], sizes = [8, 8, 32], strides = [1, 1, 1]} : vector<10x10x32xf32> to vector<8x8x32xf32>
    %10 = vector.extract_strided_slice %2 {offsets = [0, 0], sizes = [1, 32], strides = [1, 1]} : vector<9x32xf32> to vector<1x32xf32>
    %11 = vector.shape_cast %10 : vector<1x32xf32> to vector<32xf32>
    %12 = vector.shape_cast %11 : vector<32xf32> to vector<1x1x32xf32>
    %13 = vector.broadcast %12 : vector<1x1x32xf32> to vector<8x8x32xf32>
    %14 = arith.mulf %9, %13 : vector<8x8x32xf32>
    %15 = arith.addf %8, %14 : vector<8x8x32xf32>
    %16 = vector.extract_strided_slice %1 {offsets = [0, 1, 0], sizes = [8, 8, 32], strides = [1, 1, 1]} : vector<10x10x32xf32> to vector<8x8x32xf32>
    %17 = vector.extract_strided_slice %2 {offsets = [1, 0], sizes = [1, 32], strides = [1, 1]} : vector<9x32xf32> to vector<1x32xf32>
    %18 = vector.shape_cast %17 : vector<1x32xf32> to vector<32xf32>
    %19 = vector.shape_cast %18 : vector<32xf32> to vector<1x1x32xf32>
    %20 = vector.broadcast %19 : vector<1x1x32xf32> to vector<8x8x32xf32>
    %21 = arith.mulf %16, %20 : vector<8x8x32xf32>
    %22 = arith.addf %15, %21 : vector<8x8x32xf32>
    %23 = vector.extract_strided_slice %1 {offsets = [0, 2, 0], sizes = [8, 8, 32], strides = [1, 1, 1]} : vector<10x10x32xf32> to vector<8x8x32xf32>
    %24 = vector.extract_strided_slice %2 {offsets = [2, 0], sizes = [1, 32], strides = [1, 1]} : vector<9x32xf32> to vector<1x32xf32>
    %25 = vector.shape_cast %24 : vector<1x32xf32> to vector<32xf32>
    %26 = vector.shape_cast %25 : vector<32xf32> to vector<1x1x32xf32>
    %27 = vector.broadcast %26 : vector<1x1x32xf32> to vector<8x8x32xf32>
    %28 = arith.mulf %23, %27 : vector<8x8x32xf32>
    %29 = arith.addf %22, %28 : vector<8x8x32xf32>
    %30 = vector.extract_strided_slice %1 {offsets = [1, 0, 0], sizes = [8, 8, 32], strides = [1, 1, 1]} : vector<10x10x32xf32> to vector<8x8x32xf32>
    %31 = vector.extract_strided_slice %2 {offsets = [3, 0], sizes = [1, 32], strides = [1, 1]} : vector<9x32xf32> to vector<1x32xf32>
    %32 = vector.shape_cast %31 : vector<1x32xf32> to vector<32xf32>
    %33 = vector.shape_cast %32 : vector<32xf32> to vector<1x1x32xf32>
    %34 = vector.broadcast %33 : vector<1x1x32xf32> to vector<8x8x32xf32>
    %35 = arith.mulf %30, %34 : vector<8x8x32xf32>
    %36 = arith.addf %29, %35 : vector<8x8x32xf32>
    %37 = vector.extract_strided_slice %1 {offsets = [1, 1, 0], sizes = [8, 8, 32], strides = [1, 1, 1]} : vector<10x10x32xf32> to vector<8x8x32xf32>
    %38 = vector.extract_strided_slice %2 {offsets = [4, 0], sizes = [1, 32], strides = [1, 1]} : vector<9x32xf32> to vector<1x32xf32>
    %39 = vector.shape_cast %38 : vector<1x32xf32> to vector<32xf32>
    %40 = vector.shape_cast %39 : vector<32xf32> to vector<1x1x32xf32>
    %41 = vector.broadcast %40 : vector<1x1x32xf32> to vector<8x8x32xf32>
    %42 = arith.mulf %37, %41 : vector<8x8x32xf32>
    %43 = arith.addf %36, %42 : vector<8x8x32xf32>
    %44 = vector.extract_strided_slice %1 {offsets = [1, 2, 0], sizes = [8, 8, 32], strides = [1, 1, 1]} : vector<10x10x32xf32> to vector<8x8x32xf32>
    %45 = vector.extract_strided_slice %2 {offsets = [5, 0], sizes = [1, 32], strides = [1, 1]} : vector<9x32xf32> to vector<1x32xf32>
    %46 = vector.shape_cast %45 : vector<1x32xf32> to vector<32xf32>
    %47 = vector.shape_cast %46 : vector<32xf32> to vector<1x1x32xf32>
    %48 = vector.broadcast %47 : vector<1x1x32xf32> to vector<8x8x32xf32>
    %49 = arith.mulf %44, %48 : vector<8x8x32xf32>
    %50 = arith.addf %43, %49 : vector<8x8x32xf32>
    %51 = vector.extract_strided_slice %1 {offsets = [2, 0, 0], sizes = [8, 8, 32], strides = [1, 1, 1]} : vector<10x10x32xf32> to vector<8x8x32xf32>
    %52 = vector.extract_strided_slice %2 {offsets = [6, 0], sizes = [1, 32], strides = [1, 1]} : vector<9x32xf32> to vector<1x32xf32>
    %53 = vector.shape_cast %52 : vector<1x32xf32> to vector<32xf32>
    %54 = vector.shape_cast %53 : vector<32xf32> to vector<1x1x32xf32>
    %55 = vector.broadcast %54 : vector<1x1x32xf32> to vector<8x8x32xf32>
    %56 = arith.mulf %51, %55 : vector<8x8x32xf32>
    %57 = arith.addf %50, %56 : vector<8x8x32xf32>
    %58 = vector.extract_strided_slice %1 {offsets = [2, 1, 0], sizes = [8, 8, 32], strides = [1, 1, 1]} : vector<10x10x32xf32> to vector<8x8x32xf32>
    %59 = vector.extract_strided_slice %2 {offsets = [7, 0], sizes = [1, 32], strides = [1, 1]} : vector<9x32xf32> to vector<1x32xf32>
    %60 = vector.shape_cast %59 : vector<1x32xf32> to vector<32xf32>
    %61 = vector.shape_cast %60 : vector<32xf32> to vector<1x1x32xf32>
    %62 = vector.broadcast %61 : vector<1x1x32xf32> to vector<8x8x32xf32>
    %63 = arith.mulf %58, %62 : vector<8x8x32xf32>
    %64 = arith.addf %57, %63 : vector<8x8x32xf32>
    %65 = vector.extract_strided_slice %1 {offsets = [2, 2, 0], sizes = [8, 8, 32], strides = [1, 1, 1]} : vector<10x10x32xf32> to vector<8x8x32xf32>
    %66 = vector.extract_strided_slice %2 {offsets = [8, 0], sizes = [1, 32], strides = [1, 1]} : vector<9x32xf32> to vector<1x32xf32>
    %67 = vector.shape_cast %66 : vector<1x32xf32> to vector<32xf32>
    %68 = vector.shape_cast %67 : vector<32xf32> to vector<1x1x32xf32>
    %69 = vector.broadcast %68 : vector<1x1x32xf32> to vector<8x8x32xf32>
    %70 = arith.mulf %65, %69 : vector<8x8x32xf32>
    %71 = arith.addf %64, %70 : vector<8x8x32xf32>
    %c0_7 = arith.constant 0 : index
    %c0_8 = arith.constant 0 : index
    %c0_9 = arith.constant 0 : index
    %c0_10 = arith.constant 0 : index
    %72 = vector.load %arg4[%c0_7, %c0_8, %c0_9, %c0_10] : memref<1x8x8x32xf32, #tpu.memory_space<vmem>>, vector<1x8x8x32xf32>
    %73 = vector.shape_cast %72 : vector<1x8x8x32xf32> to vector<8x8x32xf32>
    %74 = vector.shape_cast %71 : vector<8x8x32xf32> to vector<1x8x8x32xf32>
    tpu.vector_store %arg4[%c0_7, %c0_8, %c0_9, %c0_10], %74 {strides = array<i32>} : memref<1x8x8x32xf32, #tpu.memory_space<vmem>>, vector<1x8x8x32xf32>,
    return
  }
  func.func @transform_0(%arg0: i32) -> (i32, i32, i32, i32) {
    %c0_i32 = arith.constant 0 : i32
    %c0_i32_0 = arith.constant 0 : i32
    %c0_i32_1 = arith.constant 0 : i32
    %c0_i32_2 = arith.constant 0 : i32
    return %arg0, %c0_i32, %c0_i32_0, %c0_i32_1 : i32, i32, i32, i32
  }
  func.func @transform_1(%arg0: i32) -> (i32, i32) {
    %c0_i32 = arith.constant 0 : i32
    %c0_i32_0 = arith.constant 0 : i32
    %c0_i32_1 = arith.constant 0 : i32
    return %c0_i32, %c0_i32_0 : i32, i32
  }
  func.func @transform_2(%arg0: i32) -> (i32, i32) {
    %c0_i32 = arith.constant 0 : i32
    %c0_i32_0 = arith.constant 0 : i32
    %c0_i32_1 = arith.constant 0 : i32
    return %c0_i32, %c0_i32_0 : i32, i32
  }
  func.func @transform_3(%arg0: i32) -> (i32, i32, i32, i32) {
    %c0_i32 = arith.constant 0 : i32
    %c0_i32_0 = arith.constant 0 : i32
    %c0_i32_1 = arith.constant 0 : i32
    %c0_i32_2 = arith.constant 0 : i32
    return %arg0, %c0_i32, %c0_i32_0, %c0_i32_1 : i32, i32, i32, i32
  }
}

</mosaic_0001>

<llo_original>
// kernel: tpu_custom_call.1
$region0: #{tpu_custom_call.1}
  #allocation0 [shape = 'u32[]', space=smem, size = 0x4, offset = 0x4, fixed_abs, tag = 'smem constant byte address 0x4 - core index']
  #allocation1 [shape = 'u32[144,128]{1,0:T(1,128)}', space=vmem, size = 0x12000, scoped, tag = 'internal scratch']
  %s0 = inlined_call_operand.vmem [shape: f32[2,10,10,32], index: 0, kind: input, shape index: {}]
  %s1 = inlined_call_operand.vmem [shape: f32[9,32], index: 1, kind: input, shape index: {}]
  %s2 = inlined_call_operand.vmem [shape: f32[1,32], index: 2, kind: input, shape index: {}]
  %s3 = inlined_call_operand.hbm [shape: f32[2,8,8,32], index: 3, kind: output, shape index: {}]
  %s4 = sld [smem:[#allocation0]]
  $region45: #{tpu_custom_call.1} parent=0
    _
  %s6 = ssub.s32 1, %s4
  %s7 = scalar_select 0, %s6, %s4
  $region1: #{tpu_custom_call.1} parent=0
    #allocation2 [shape = 'u8[65536]{0}', space=vmem, size = 0x10000, scoped, tag = 'output window, operand 0']
    #allocation3 [shape = 's32[2]{0}', space=sflag, size = 0x8, scoped, tag = 'scoped memory for tpu_custom_call.1']
    %8 = vsyncpa [#allocation3], 0
    %s9 = scalar_lea.sflag [#allocation3], 1
    %10 = vsyncpa %s9, 0
    loop: start=0, step=1, limit=4
    $region2: #{tpu_custom_call.1} parent=1 // loop_pre_header
      _
    $region3: #{tpu_custom_call.1} parent=1 // loop_header
      %s12 = sphi 0, %s16
      %p13 = scmp.ge.s32.totalorder %s12, 4
      %s22 = sphi 0, %s24
      %s25 = sphi 0, %s22
      %s26 = sphi 0, %s25
      %s42 = sphi 0, %s26
      %s46 = sphi 0, %s46
      %s48 = sphi 0, %s46
      %s49 = sphi 0, %s48
      %s63 = sphi 0, %s49
      %s67 = sphi 0, %s67
      %s69 = sphi 0, %s67
      %s70 = sphi 0, %s69
      %s84 = sphi 0, %s70
      %s90 = sphi 0, %s92
      %s93 = sphi 0, %s90
      %s94 = sphi 0, %s93
      %s110 = sphi 0, %s94
    $region4: #{tpu_custom_call.1} parent=1 // loop_header_branch
      %15 = sbr.rel (%p13) target = $region8
    $region5: #{tpu_custom_call.1} parent=1 // loop_body
      %s17 = ssub.s32 %s12, 1
      %s18 = ssub.s32 %s12, 2
      %s19 = sadd.s32 %s12, 1
      %s20 = ssub.s32 %s12, %s19
      %p21 = scmp.eq.s32.totalorder %s20, 0
      %s23 = sadd.s32 %s22, 1
      %s24 = scalar_select %p21, %s22, %s23
      %p27 = pneg %p21
      %p28 = scmp.eq.s32.totalorder %s12, 1
      %p29 = por %p27, %p28
      %p30 = scmp.ne.s32.totalorder %s22, %s25
      %p31 = scmp.eq.s32.totalorder %s12, 0
      %p32 = por %p30, %p31
      %p33 = scmp.ne.s32.totalorder %s22, %s25
      %p34 = scmp.eq.s32.totalorder %s17, 1
      %p35 = por %p33, %p34
      %p36 = scmp.ne.s32.totalorder %s25, %s26
      %p37 = scmp.eq.s32.totalorder %s17, 0
      %p38 = por %p36, %p37
      %p39 = scmp.ne.s32.totalorder %s25, %s26
      %p40 = scmp.eq.s32.totalorder %s18, 1
      %p41 = por %p39, %p40
      %p43 = scmp.ne.s32.totalorder %s26, %s42
      %p44 = scmp.eq.s32.totalorder %s18, 0
      %p45 = por %p43, %p44
      %s47 = sadd.s32 %s46, 1
      %p50 = scmp.eq.s32.totalorder %s12, 1
      %p51 = scmp.ne.s32.totalorder %s46, %s48
      %p52 = scmp.eq.s32.totalorder %s12, 0
      %p53 = por %p51, %p52
      %p54 = scmp.ne.s32.totalorder %s46, %s48
      %p55 = scmp.eq.s32.totalorder %s17, 1
      %p56 = por %p54, %p55
      %p57 = scmp.ne.s32.totalorder %s48, %s49
      %p58 = scmp.eq.s32.totalorder %s17, 0
      %p59 = por %p57, %p58
      %p60 = scmp.ne.s32.totalorder %s48, %s49
      %p61 = scmp.eq.s32.totalorder %s18, 1
      %p62 = por %p60, %p61
      %p64 = scmp.ne.s32.totalorder %s49, %s63
      %p65 = scmp.eq.s32.totalorder %s18, 0
      %p66 = por %p64, %p65
      %s68 = sadd.s32 %s67, 1
      %p71 = scmp.eq.s32.totalorder %s12, 1
      %p72 = scmp.ne.s32.totalorder %s67, %s69
      %p73 = scmp.eq.s32.totalorder %s12, 0
      %p74 = por %p72, %p73
      %p75 = scmp.ne.s32.totalorder %s67, %s69
      %p76 = scmp.eq.s32.totalorder %s17, 1
      %p77 = por %p75, %p76
      %p78 = scmp.ne.s32.totalorder %s69, %s70
      %p79 = scmp.eq.s32.totalorder %s17, 0
      %p80 = por %p78, %p79
      %p81 = scmp.ne.s32.totalorder %s69, %s70
      %p82 = scmp.eq.s32.totalorder %s18, 1
      %p83 = por %p81, %p82
      %p85 = scmp.ne.s32.totalorder %s70, %s84
      %p86 = scmp.eq.s32.totalorder %s18, 0
      %p87 = por %p85, %p86
      %s88 = ssub.s32 %s12, %s19
      %p89 = scmp.eq.s32.totalorder %s88, 0
      %s91 = sadd.s32 %s90, 1
      %s92 = scalar_select %p89, %s90, %s91
      %p95 = pneg %p89
      %p96 = scmp.eq.s32.totalorder %s12, 1
      %p97 = por %p95, %p96
      %p98 = scmp.ne.s32.totalorder %s90, %s93
      %p99 = scmp.eq.s32.totalorder %s12, 0
      %p100 = por %p98, %p99
      %p101 = scmp.ne.s32.totalorder %s90, %s93
      %p102 = scmp.eq.s32.totalorder %s17, 1
      %p103 = por %p101, %p102
      %p104 = scmp.ne.s32.totalorder %s93, %s94
      %p105 = scmp.eq.s32.totalorder %s17, 0
      %p106 = por %p104, %p105
      %p107 = scmp.ne.s32.totalorder %s93, %s94
      %p108 = scmp.eq.s32.totalorder %s18, 1
      %p109 = por %p107, %p108
      %p111 = scmp.ne.s32.totalorder %s94, %s110
      %p112 = scmp.eq.s32.totalorder %s18, 0
      %p113 = por %p111, %p112
      %p114 = scmp.le.s32.totalorder 1, %s12
      %p115 = scmp.lt.s32.totalorder %s12, 3
      %p116 = pnand %p114, %p115
      %p117 = pneg %p116
      // Predicated region
      $region9: #{tpu_custom_call.1} parent=5 // pred_check
        _
      $region10: #{tpu_custom_call.1} parent=5 // pred_check_branch
        %119 = sbr.rel (%p116) target = $region12
      $region11: #{tpu_custom_call.1} parent=5 // pred_region
        %s120 = ssub.s32 %s12, 1
        // Predicated region
        $region13: #{tpu_custom_call.1} parent=11 // pred_check
          %p121 = pneg %p59
        $region14: #{tpu_custom_call.1} parent=11 // pred_check_branch
          %123 = sbr.rel (%p121) target = $region16
        $region15: #{tpu_custom_call.1} parent=11 // pred_region
          _
        $region16: #{tpu_custom_call.1} parent=11 // pred_fallthru
          _
        // Predicated region
        $region17: #{tpu_custom_call.1} parent=11 // pred_check
          %p124 = pneg %p80
        $region18: #{tpu_custom_call.1} parent=11 // pred_check_branch
          %126 = sbr.rel (%p124) target = $region20
        $region19: #{tpu_custom_call.1} parent=11 // pred_region
          _
        $region20: #{tpu_custom_call.1} parent=11 // pred_fallthru
          _
      $region12: #{tpu_custom_call.1} parent=5 // pred_fallthru
        _
      %p127 = scmp.lt.s32.totalorder %s12, 2
      // Predicated region
      $region21: #{tpu_custom_call.1} parent=5 // pred_check
        %p128 = pneg %p127
      $region22: #{tpu_custom_call.1} parent=5 // pred_check_branch
        %130 = sbr.rel (%p128) target = $region24
      $region23: #{tpu_custom_call.1} parent=5 // pred_region
        // Predicated region
        $region25: #{tpu_custom_call.1} parent=23 // pred_check
          %p131 = pneg %p32
        $region26: #{tpu_custom_call.1} parent=23 // pred_check_branch
          %133 = sbr.rel (%p131) target = $region28
        $region27: #{tpu_custom_call.1} parent=23 // pred_region
          %p134 = scmp.lt.s32.totalorder %s12, 1
          %s135 = scalar_select %p134, %s12, 1
          %s136 = smul.addr %s135, 20
          %s137 = smul.addr %s136, 8
          %s138 = scalar_lea.vmem %s0, %s137
        $region28: #{tpu_custom_call.1} parent=23 // pred_fallthru
          _
      $region24: #{tpu_custom_call.1} parent=5 // pred_fallthru
        _
      %p139 = scmp.le.s32.totalorder 1, %s12
      %p140 = scmp.lt.s32.totalorder %s12, 3
      %p141 = pnand %p139, %p140
      %p142 = pneg %p141
      // Predicated region
      $region29: #{tpu_custom_call.1} parent=5 // pred_check
        _
      $region30: #{tpu_custom_call.1} parent=5 // pred_check_branch
        %144 = sbr.rel (%p141) target = $region32
      $region31: #{tpu_custom_call.1} parent=5 // pred_region
        %s145 = ssub.s32 %s12, 1
        %p146 = scmp.lt.s32.totalorder %s17, 1
        %s147 = scalar_select %p146, %s17, 1
        %s148 = smul.addr %s147, 20
        %s149 = smul.addr %s148, 8
        %s150 = scalar_lea.vmem %s0, %s149
        %p151 = pneg %p38
        %p152 = pneg %p35
        %p153 = pneg %p59
        %p154 = pneg %p56
        %p155 = pneg %p80
        %p156 = pneg %p77
        %p157 = pneg %p106
        %p158 = pneg %p103
        %s159 = sand.u32 %s93, 1
        %s160 = scalar_lea.sflag [#allocation3], %s159
        %s161 = sand.u32 %s93, 1
        %s162 = smul.addr %s161, 64
        %s163 = scalar_lea.vmem [#allocation2], %s162
        %p164 = scmp.lt.s32.totalorder %s17, 1
        %s165 = scalar_select %p164, %s17, 1
        %s166 = smul.addr %s165, 20
        %s167 = smul.addr %s166, 8
        %s168 = scalar_lea.vmem %s0, %s167
        %v169 = vld [vmem:[%s168] sm:$0xff]
        %v170 = vld [vmem:[%s168 + $0x8] sm:$0x3]
        %v171 = vld [vmem:[%s168 + $0x10] sm:$0xff]
        %v172 = vld [vmem:[%s168 + $0x18] sm:$0x3]
        %v173 = vld [vmem:[%s168 + $0x20] sm:$0xff]
        %v174 = vld [vmem:[%s168 + $0x28] sm:$0x3]
        %v175 = vld [vmem:[%s168 + $0x30] sm:$0xff]
        %v176 = vld [vmem:[%s168 + $0x38] sm:$0x3]
        %v177 = vld [vmem:[%s168 + $0x40] sm:$0xff]
        %v178 = vld [vmem:[%s168 + $0x48] sm:$0x3]
        %v179 = vld [vmem:[%s168 + $0x50] sm:$0xff]
        %v180 = vld [vmem:[%s168 + $0x58] sm:$0x3]
        %v181 = vld [vmem:[%s168 + $0x60] sm:$0xff]
        %v182 = vld [vmem:[%s168 + $0x68] sm:$0x3]
        %v183 = vld [vmem:[%s168 + $0x70] sm:$0xff]
        %v184 = vld [vmem:[%s168 + $0x78] sm:$0x3]
        %v185 = vld [vmem:[%s168 + $0x80] sm:$0xff]
        %v186 = vld [vmem:[%s168 + $0x88] sm:$0x3]
        %v187 = vld [vmem:[%s168 + $0x90] sm:$0xff]
        %v188 = vld [vmem:[%s168 + $0x98] sm:$0x3]
        %v189 = vld [vmem:[%s1] sm:$0xff]
        %v190 = vld [vmem:[%s1 + $0x8] sm:$0x1]
        %v191 = vld [vmem:[%s2] sm:$0x1]
        %v193 = vlaneseq
        %v194 = vshrl.u32 %v193, 7
        %v195 = vsub.s32 0, %v194
        %v196 = vrot.slane %v191, %v195
        %v198 = vadd.f32 %v171, %v196
        %v199 = vadd.f32 %v172, %v196
        %v200 = vadd.f32 %v173, %v196
        %v201 = vadd.f32 %v174, %v196
        %v202 = vadd.f32 %v175, %v196
        %v203 = vadd.f32 %v176, %v196
        %v204 = vadd.f32 %v177, %v196
        %v205 = vadd.f32 %v178, %v196
        %v206 = vadd.f32 %v179, %v196
        %v207 = vadd.f32 %v180, %v196
        %v208 = vadd.f32 %v181, %v196
        %v209 = vadd.f32 %v182, %v196
        %v210 = vadd.f32 %v183, %v196
        %v211 = vadd.f32 %v184, %v196
        %v212 = vadd.f32 %v185, %v196
        %v213 = vadd.f32 %v186, %v196
        %v214 = vlaneseq
        %v215 = vshrl.u32 %v214, 7
        %v216 = vsub.s32 0, %v215
        %v217 = vrot.slane %v189, %v216
        %v218 = vmul.f32 %v169, %v217
        %v219 = vmul.f32 %v171, %v217
        %v220 = vmul.f32 %v173, %v217
        %v221 = vmul.f32 %v175, %v217
        %v222 = vmul.f32 %v177, %v217
        %v223 = vmul.f32 %v179, %v217
        %v224 = vmul.f32 %v181, %v217
        %v225 = vmul.f32 %v183, %v217
        %v234 = vrot.slane %v218, 7
        %v235 = vrot.slane %v219, 7
        %v236 = vrot.slane %v220, 7
        %v237 = vrot.slane %v221, 7
        %v238 = vrot.slane %v222, 7
        %v239 = vrot.slane %v223, 7
        %v240 = vrot.slane %v224, 7
        %v241 = vrot.slane %v225, 7
        %v250 = vadd.f32 %v198, %v234
        %v251 = vadd.f32 %v199, %v234
        %v252 = vadd.f32 %v200, %v235
        %v253 = vadd.f32 %v201, %v235
        %v254 = vadd.f32 %v202, %v236
        %v255 = vadd.f32 %v203, %v236
        %v256 = vadd.f32 %v204, %v237
        %v257 = vadd.f32 %v205, %v237
        %v258 = vadd.f32 %v206, %v238
        %v259 = vadd.f32 %v207, %v238
        %v260 = vadd.f32 %v208, %v239
        %v261 = vadd.f32 %v209, %v239
        %v262 = vadd.f32 %v210, %v240
        %v263 = vadd.f32 %v211, %v240
        %v264 = vadd.f32 %v212, %v241
        %v265 = vadd.f32 %v213, %v241
        %v266 = vlaneseq
        %v267 = vshrl.u32 %v266, 7
        %v268 = vsub.s32 1, %v267
        %v269 = vrot.slane %v189, %v268
        %v270 = vmul.f32 %v169, %v269
        %v271 = vmul.f32 %v170, %v269
        %v272 = vmul.f32 %v171, %v269
        %v273 = vmul.f32 %v172, %v269
        %v274 = vmul.f32 %v173, %v269
        %v275 = vmul.f32 %v174, %v269
        %v276 = vmul.f32 %v175, %v269
        %v277 = vmul.f32 %v176, %v269
        %v278 = vmul.f32 %v177, %v269
        %v279 = vmul.f32 %v178, %v269
        %v280 = vmul.f32 %v179, %v269
        %v281 = vmul.f32 %v180, %v269
        %v282 = vmul.f32 %v181, %v269
        %v283 = vmul.f32 %v182, %v269
        %v284 = vmul.f32 %v183, %v269
        %v285 = vmul.f32 %v184, %v269
        %v286 = vadd.f32 %v250, %v270
        %v287 = vadd.f32 %v251, %v271
        %v288 = vadd.f32 %v252, %v272
        %v289 = vadd.f32 %v253, %v273
        %v290 = vadd.f32 %v254, %v274
        %v291 = vadd.f32 %v255, %v275
        %v292 = vadd.f32 %v256, %v276
        %v293 = vadd.f32 %v257, %v277
        %v294 = vadd.f32 %v258, %v278
        %v295 = vadd.f32 %v259, %v279
        %v296 = vadd.f32 %v260, %v280
        %v297 = vadd.f32 %v261, %v281
        %v298 = vadd.f32 %v262, %v282
        %v299 = vadd.f32 %v263, %v283
        %v300 = vadd.f32 %v264, %v284
        %v301 = vadd.f32 %v265, %v285
        %v302 = vlaneseq
        %v303 = vshrl.u32 %v302, 7
        %v304 = vsub.s32 2, %v303
        %v305 = vrot.slane %v189, %v304
        %v306 = vmul.f32 %v169, %v305
        %v307 = vmul.f32 %v170, %v305
        %v308 = vmul.f32 %v171, %v305
        %v309 = vmul.f32 %v172, %v305
        %v310 = vmul.f32 %v173, %v305
        %v311 = vmul.f32 %v174, %v305
        %v312 = vmul.f32 %v175, %v305
        %v313 = vmul.f32 %v176, %v305
        %v314 = vmul.f32 %v177, %v305
        %v315 = vmul.f32 %v178, %v305
        %v316 = vmul.f32 %v179, %v305
        %v317 = vmul.f32 %v180, %v305
        %v318 = vmul.f32 %v181, %v305
        %v319 = vmul.f32 %v182, %v305
        %v320 = vmul.f32 %v183, %v305
        %v321 = vmul.f32 %v184, %v305
        %vm338 = vcmask 1046528
        %v339 = vrot.slane %v306, 1
        %v340 = vrot.slane %v307, 1
        %v341 = vsel %vm338, %v339, %v340
        %v342 = vrot.slane %v308, 1
        %v343 = vrot.slane %v309, 1
        %v344 = vsel %vm338, %v342, %v343
        %v345 = vrot.slane %v310, 1
        %v346 = vrot.slane %v311, 1
        %v347 = vsel %vm338, %v345, %v346
        %v348 = vrot.slane %v312, 1
        %v349 = vrot.slane %v313, 1
        %v350 = vsel %vm338, %v348, %v349
        %v351 = vrot.slane %v314, 1
        %v352 = vrot.slane %v315, 1
        %v353 = vsel %vm338, %v351, %v352
        %v354 = vrot.slane %v316, 1
        %v355 = vrot.slane %v317, 1
        %v356 = vsel %vm338, %v354, %v355
        %v357 = vrot.slane %v318, 1
        %v358 = vrot.slane %v319, 1
        %v359 = vsel %vm338, %v357, %v358
        %v360 = vrot.slane %v320, 1
        %v361 = vrot.slane %v321, 1
        %v362 = vsel %vm338, %v360, %v361
        %v379 = vadd.f32 %v286, %v341
        %v380 = vadd.f32 %v287, %v340
        %v381 = vadd.f32 %v288, %v344
        %v382 = vadd.f32 %v289, %v343
        %v383 = vadd.f32 %v290, %v347
        %v384 = vadd.f32 %v291, %v346
        %v385 = vadd.f32 %v292, %v350
        %v386 = vadd.f32 %v293, %v349
        %v387 = vadd.f32 %v294, %v353
        %v388 = vadd.f32 %v295, %v352
        %v389 = vadd.f32 %v296, %v356
        %v390 = vadd.f32 %v297, %v355
        %v391 = vadd.f32 %v298, %v359
        %v392 = vadd.f32 %v299, %v358
        %v393 = vadd.f32 %v300, %v362
        %v394 = vadd.f32 %v301, %v361
        %v395 = vlaneseq
        %v396 = vshrl.u32 %v395, 7
        %v397 = vsub.s32 3, %v396
        %v398 = vrot.slane %v189, %v397
        %v399 = vmul.f32 %v171, %v398
        %v400 = vmul.f32 %v173, %v398
        %v401 = vmul.f32 %v175, %v398
        %v402 = vmul.f32 %v177, %v398
        %v403 = vmul.f32 %v179, %v398
        %v404 = vmul.f32 %v181, %v398
        %v405 = vmul.f32 %v183, %v398
        %v406 = vmul.f32 %v185, %v398
        %v415 = vrot.slane %v399, 7
        %v416 = vrot.slane %v400, 7
        %v417 = vrot.slane %v401, 7
        %v418 = vrot.slane %v402, 7
        %v419 = vrot.slane %v403, 7
        %v420 = vrot.slane %v404, 7
        %v421 = vrot.slane %v405, 7
        %v422 = vrot.slane %v406, 7
        %v431 = vadd.f32 %v379, %v415
        %v432 = vadd.f32 %v380, %v415
        %v433 = vadd.f32 %v381, %v416
        %v434 = vadd.f32 %v382, %v416
        %v435 = vadd.f32 %v383, %v417
        %v436 = vadd.f32 %v384, %v417
        %v437 = vadd.f32 %v385, %v418
        %v438 = vadd.f32 %v386, %v418
        %v439 = vadd.f32 %v387, %v419
        %v440 = vadd.f32 %v388, %v419
        %v441 = vadd.f32 %v389, %v420
        %v442 = vadd.f32 %v390, %v420
        %v443 = vadd.f32 %v391, %v421
        %v444 = vadd.f32 %v392, %v421
        %v445 = vadd.f32 %v393, %v422
        %v446 = vadd.f32 %v394, %v422
        %v447 = vlaneseq
        %v448 = vshrl.u32 %v447, 7
        %v449 = vsub.s32 4, %v448
        %v450 = vrot.slane %v189, %v449
        %v451 = vmul.f32 %v171, %v450
        %v452 = vmul.f32 %v172, %v450
        %v453 = vmul.f32 %v173, %v450
        %v454 = vmul.f32 %v174, %v450
        %v455 = vmul.f32 %v175, %v450
        %v456 = vmul.f32 %v176, %v450
        %v457 = vmul.f32 %v177, %v450
        %v458 = vmul.f32 %v178, %v450
        %v459 = vmul.f32 %v179, %v450
        %v460 = vmul.f32 %v180, %v450
        %v461 = vmul.f32 %v181, %v450
        %v462 = vmul.f32 %v182, %v450
        %v463 = vmul.f32 %v183, %v450
        %v464 = vmul.f32 %v184, %v450
        %v465 = vmul.f32 %v185, %v450
        %v466 = vmul.f32 %v186, %v450
        %v467 = vadd.f32 %v431, %v451
        %v468 = vadd.f32 %v432, %v452
        %v469 = vadd.f32 %v433, %v453
        %v470 = vadd.f32 %v434, %v454
        %v471 = vadd.f32 %v435, %v455
        %v472 = vadd.f32 %v436, %v456
        %v473 = vadd.f32 %v437, %v457
        %v474 = vadd.f32 %v438, %v458
        %v475 = vadd.f32 %v439, %v459
        %v476 = vadd.f32 %v440, %v460
        %v477 = vadd.f32 %v441, %v461
        %v478 = vadd.f32 %v442, %v462
        %v479 = vadd.f32 %v443, %v463
        %v480 = vadd.f32 %v444, %v464
        %v481 = vadd.f32 %v445, %v465
        %v482 = vadd.f32 %v446, %v466
        %v483 = vlaneseq
        %v484 = vshrl.u32 %v483, 7
        %v485 = vsub.s32 5, %v484
        %v486 = vrot.slane %v189, %v485
        %v487 = vmul.f32 %v171, %v486
        %v488 = vmul.f32 %v172, %v486
        %v489 = vmul.f32 %v173, %v486
        %v490 = vmul.f32 %v174, %v486
        %v491 = vmul.f32 %v175, %v486
        %v492 = vmul.f32 %v176, %v486
        %v493 = vmul.f32 %v177, %v486
        %v494 = vmul.f32 %v178, %v486
        %v495 = vmul.f32 %v179, %v486
        %v496 = vmul.f32 %v180, %v486
        %v497 = vmul.f32 %v181, %v486
        %v498 = vmul.f32 %v182, %v486
        %v499 = vmul.f32 %v183, %v486
        %v500 = vmul.f32 %v184, %v486
        %v501 = vmul.f32 %v185, %v486
        %v502 = vmul.f32 %v186, %v486
        %v519 = vrot.slane %v487, 1
        %v520 = vrot.slane %v488, 1
        %v521 = vsel %vm338, %v519, %v520
        %v522 = vrot.slane %v489, 1
        %v523 = vrot.slane %v490, 1
        %v524 = vsel %vm338, %v522, %v523
        %v525 = vrot.slane %v491, 1
        %v526 = vrot.slane %v492, 1
        %v527 = vsel %vm338, %v525, %v526
        %v528 = vrot.slane %v493, 1
        %v529 = vrot.slane %v494, 1
        %v530 = vsel %vm338, %v528, %v529
        %v531 = vrot.slane %v495, 1
        %v532 = vrot.slane %v496, 1
        %v533 = vsel %vm338, %v531, %v532
        %v534 = vrot.slane %v497, 1
        %v535 = vrot.slane %v498, 1
        %v536 = vsel %vm338, %v534, %v535
        %v537 = vrot.slane %v499, 1
        %v538 = vrot.slane %v500, 1
        %v539 = vsel %vm338, %v537, %v538
        %v540 = vrot.slane %v501, 1
        %v541 = vrot.slane %v502, 1
        %v542 = vsel %vm338, %v540, %v541
        %v559 = vadd.f32 %v467, %v521
        %v560 = vadd.f32 %v468, %v520
        %v561 = vadd.f32 %v469, %v524
        %v562 = vadd.f32 %v470, %v523
        %v563 = vadd.f32 %v471, %v527
        %v564 = vadd.f32 %v472, %v526
        %v565 = vadd.f32 %v473, %v530
        %v566 = vadd.f32 %v474, %v529
        %v567 = vadd.f32 %v475, %v533
        %v568 = vadd.f32 %v476, %v532
        %v569 = vadd.f32 %v477, %v536
        %v570 = vadd.f32 %v478, %v535
        %v571 = vadd.f32 %v479, %v539
        %v572 = vadd.f32 %v480, %v538
        %v573 = vadd.f32 %v481, %v542
        %v574 = vadd.f32 %v482, %v541
        %v575 = vlaneseq
        %v576 = vshrl.u32 %v575, 7
        %v577 = vsub.s32 6, %v576
        %v578 = vrot.slane %v189, %v577
        %v579 = vmul.f32 %v173, %v578
        %v580 = vmul.f32 %v175, %v578
        %v581 = vmul.f32 %v177, %v578
        %v582 = vmul.f32 %v179, %v578
        %v583 = vmul.f32 %v181, %v578
        %v584 = vmul.f32 %v183, %v578
        %v585 = vmul.f32 %v185, %v578
        %v586 = vmul.f32 %v187, %v578
        %v595 = vrot.slane %v579, 7
        %v596 = vrot.slane %v580, 7
        %v597 = vrot.slane %v581, 7
        %v598 = vrot.slane %v582, 7
        %v599 = vrot.slane %v583, 7
        %v600 = vrot.slane %v584, 7
        %v601 = vrot.slane %v585, 7
        %v602 = vrot.slane %v586, 7
        %v611 = vadd.f32 %v559, %v595
        %v612 = vadd.f32 %v560, %v595
        %v613 = vadd.f32 %v561, %v596
        %v614 = vadd.f32 %v562, %v596
        %v615 = vadd.f32 %v563, %v597
        %v616 = vadd.f32 %v564, %v597
        %v617 = vadd.f32 %v565, %v598
        %v618 = vadd.f32 %v566, %v598
        %v619 = vadd.f32 %v567, %v599
        %v620 = vadd.f32 %v568, %v599
        %v621 = vadd.f32 %v569, %v600
        %v622 = vadd.f32 %v570, %v600
        %v623 = vadd.f32 %v571, %v601
        %v624 = vadd.f32 %v572, %v601
        %v625 = vadd.f32 %v573, %v602
        %v626 = vadd.f32 %v574, %v602
        %v627 = vlaneseq
        %v628 = vshrl.u32 %v627, 7
        %v629 = vsub.s32 7, %v628
        %v630 = vrot.slane %v189, %v629
        %v631 = vmul.f32 %v173, %v630
        %v632 = vmul.f32 %v174, %v630
        %v633 = vmul.f32 %v175, %v630
        %v634 = vmul.f32 %v176, %v630
        %v635 = vmul.f32 %v177, %v630
        %v636 = vmul.f32 %v178, %v630
        %v637 = vmul.f32 %v179, %v630
        %v638 = vmul.f32 %v180, %v630
        %v639 = vmul.f32 %v181, %v630
        %v640 = vmul.f32 %v182, %v630
        %v641 = vmul.f32 %v183, %v630
        %v642 = vmul.f32 %v184, %v630
        %v643 = vmul.f32 %v185, %v630
        %v644 = vmul.f32 %v186, %v630
        %v645 = vmul.f32 %v187, %v630
        %v646 = vmul.f32 %v188, %v630
        %v647 = vadd.f32 %v611, %v631
        %v648 = vadd.f32 %v612, %v632
        %v649 = vadd.f32 %v613, %v633
        %v650 = vadd.f32 %v614, %v634
        %v651 = vadd.f32 %v615, %v635
        %v652 = vadd.f32 %v616, %v636
        %v653 = vadd.f32 %v617, %v637
        %v654 = vadd.f32 %v618, %v638
        %v655 = vadd.f32 %v619, %v639
        %v656 = vadd.f32 %v620, %v640
        %v657 = vadd.f32 %v621, %v641
        %v658 = vadd.f32 %v622, %v642
        %v659 = vadd.f32 %v623, %v643
        %v660 = vadd.f32 %v624, %v644
        %v661 = vadd.f32 %v625, %v645
        %v662 = vadd.f32 %v626, %v646
        %v663 = vlaneseq
        %v664 = vshrl.u32 %v663, 7
        %v665 = vsub.s32 0, %v664
        %v666 = vrot.slane %v190, %v665
        %v667 = vmul.f32 %v173, %v666
        %v668 = vmul.f32 %v174, %v666
        %v669 = vmul.f32 %v175, %v666
        %v670 = vmul.f32 %v176, %v666
        %v671 = vmul.f32 %v177, %v666
        %v672 = vmul.f32 %v178, %v666
        %v673 = vmul.f32 %v179, %v666
        %v674 = vmul.f32 %v180, %v666
        %v675 = vmul.f32 %v181, %v666
        %v676 = vmul.f32 %v182, %v666
        %v677 = vmul.f32 %v183, %v666
        %v678 = vmul.f32 %v184, %v666
        %v679 = vmul.f32 %v185, %v666
        %v680 = vmul.f32 %v186, %v666
        %v681 = vmul.f32 %v187, %v666
        %v682 = vmul.f32 %v188, %v666
        %v699 = vrot.slane %v667, 1
        %v700 = vrot.slane %v668, 1
        %v701 = vsel %vm338, %v699, %v700
        %v702 = vrot.slane %v669, 1
        %v703 = vrot.slane %v670, 1
        %v704 = vsel %vm338, %v702, %v703
        %v705 = vrot.slane %v671, 1
        %v706 = vrot.slane %v672, 1
        %v707 = vsel %vm338, %v705, %v706
        %v708 = vrot.slane %v673, 1
        %v709 = vrot.slane %v674, 1
        %v710 = vsel %vm338, %v708, %v709
        %v711 = vrot.slane %v675, 1
        %v712 = vrot.slane %v676, 1
        %v713 = vsel %vm338, %v711, %v712
        %v714 = vrot.slane %v677, 1
        %v715 = vrot.slane %v678, 1
        %v716 = vsel %vm338, %v714, %v715
        %v717 = vrot.slane %v679, 1
        %v718 = vrot.slane %v680, 1
        %v719 = vsel %vm338, %v717, %v718
        %v720 = vrot.slane %v681, 1
        %v721 = vrot.slane %v682, 1
        %v722 = vsel %vm338, %v720, %v721
        %v739 = vadd.f32 %v647, %v701
        %v740 = vadd.f32 %v648, %v700
        %v741 = vadd.f32 %v649, %v704
        %v742 = vadd.f32 %v650, %v703
        %v743 = vadd.f32 %v651, %v707
        %v744 = vadd.f32 %v652, %v706
        %v745 = vadd.f32 %v653, %v710
        %v746 = vadd.f32 %v654, %v709
        %v747 = vadd.f32 %v655, %v713
        %v748 = vadd.f32 %v656, %v712
        %v749 = vadd.f32 %v657, %v716
        %v750 = vadd.f32 %v658, %v715
        %v751 = vadd.f32 %v659, %v719
        %v752 = vadd.f32 %v660, %v718
        %v753 = vadd.f32 %v661, %v722
        %v754 = vadd.f32 %v662, %v721
        %vm755 = vcmask 261121
        %756 = vst.msk [vmem:[%s163 - $0x1] sm:$0xfe] %vm755, %v739
        %vm757 = vcmask 253952
        %758 = vst.msk [vmem:[%s163 + $0x7] sm:$0x1] %vm757, %v740
        %759 = vst.msk [vmem:[%s163 + $0x7] sm:$0xfe] %vm755, %v741
        %760 = vst.msk [vmem:[%s163 + $0xf] sm:$0x1] %vm757, %v742
        %761 = vst.msk [vmem:[%s163 + $0xf] sm:$0xfe] %vm755, %v743
        %762 = vst.msk [vmem:[%s163 + $0x17] sm:$0x1] %vm757, %v744
        %763 = vst.msk [vmem:[%s163 + $0x17] sm:$0xfe] %vm755, %v745
        %764 = vst.msk [vmem:[%s163 + $0x1f] sm:$0x1] %vm757, %v746
        %765 = vst.msk [vmem:[%s163 + $0x1f] sm:$0xfe] %vm755, %v747
        %766 = vst.msk [vmem:[%s163 + $0x27] sm:$0x1] %vm757, %v748
        %767 = vst.msk [vmem:[%s163 + $0x27] sm:$0xfe] %vm755, %v749
        %768 = vst.msk [vmem:[%s163 + $0x2f] sm:$0x1] %vm757, %v750
        %769 = vst.msk [vmem:[%s163 + $0x2f] sm:$0xfe] %vm755, %v751
        %770 = vst.msk [vmem:[%s163 + $0x37] sm:$0x1] %vm757, %v752
        %771 = vst.msk [vmem:[%s163 + $0x37] sm:$0xfe] %vm755, %v753
        %772 = vst.msk [vmem:[%s163 + $0x3f] sm:$0x1] %vm757, %v754
        %s773 = sand.u32 %s93, 1
        %s774 = scalar_lea.sflag [#allocation3], %s773
        %s775 = sand.u32 %s93, 1
        %s776 = smul.addr %s775, 64
        %s777 = scalar_lea.vmem [#allocation2], %s776
        // Predicated region
        $region33: #{tpu_custom_call.1} parent=31 // pred_check
          %p778 = pneg %p103
        $region34: #{tpu_custom_call.1} parent=31 // pred_check_branch
          %780 = sbr.rel (%p778) target = $region36
        $region35: #{tpu_custom_call.1} parent=31 // pred_region
          %s782 = ssub.s32 1024, 1024
          %783 = vsyncadd %s774, %s782
          %s784 = smul.addr %s17, 8
          %s785 = smul.addr %s784, 128
          %s786 = scalar_lea.hbm %s3, %s785
          %s787 = sshll.u32 %s777, 4
          %s788 = int_to_ptr.vmem [resolvable:$true] %s787
          %793 = dma.vmem_to_hbm [thread:$0]  %s788, 1024, %s786, %s774, 128, 128, 8
        $region36: #{tpu_custom_call.1} parent=31 // pred_fallthru
          _
      $region32: #{tpu_custom_call.1} parent=5 // pred_fallthru
        _
      %p794 = scmp.le.s32.totalorder 2, %s12
      // Predicated region
      $region37: #{tpu_custom_call.1} parent=5 // pred_check
        %p795 = pneg %p794
      $region38: #{tpu_custom_call.1} parent=5 // pred_check_branch
        %797 = sbr.rel (%p795) target = $region40
      $region39: #{tpu_custom_call.1} parent=5 // pred_region
        %s798 = ssub.s32 %s12, 2
        // Predicated region
        $region41: #{tpu_custom_call.1} parent=39 // pred_check
          %p799 = pneg %p109
        $region42: #{tpu_custom_call.1} parent=39 // pred_check_branch
          %801 = sbr.rel (%p799) target = $region44
        $region43: #{tpu_custom_call.1} parent=39 // pred_region
          %s802 = sand.u32 %s94, 1
          %s803 = scalar_lea.sflag [#allocation3], %s802
          %s804 = sand.u32 %s94, 1
          %s805 = smul.addr %s804, 64
          %s806 = scalar_lea.vmem [#allocation2], %s805
          %807 = dma.done %s803, 1024
        $region44: #{tpu_custom_call.1} parent=39 // pred_fallthru
          _
      $region40: #{tpu_custom_call.1} parent=5 // pred_fallthru
        _
    $region6: #{tpu_custom_call.1} parent=1 // loop_footer
      %s16 = sadd.s32 1, %s12
    $region7: #{tpu_custom_call.1} parent=1 // loop_footer_branch
      %11 = sbr.rel target = $region3
    $region8: #{tpu_custom_call.1} parent=1 // loop_exit
      _
    %808 = vsyncpa [#allocation3], 1
    %s809 = scalar_lea.sflag [#allocation3], 1
    %810 = vsyncpa %s809, 1

</llo_original>
